<compile_context>
chip_gen: v7x
topology: tpu7x:2x2x1
jax: 0.10.0
libtpu: 0.0.40
codegen_flags: <defaults>
</compile_context>

<pallas_src>
import functools

import jax
import jax.numpy as jnp
from jax import lax
from jax.experimental import pallas as pl
from jax.experimental.pallas import tpu as pltpu


def _round_up(x, m):
    return (x + m - 1) // m * m


def _ceil_div(a, b):
    return (a + b - 1) // b


def _default_lane_multiple():
    """256 on v6e/v7x (2x256x256 bf16 MXU), 128 on v5e and older (4x128x128)."""
    try:
        kind = jax.devices()[0].device_kind.lower()
    except Exception:
        return 128
    return 256 if ("v6" in kind or "v7" in kind) else 128


# --------------------------------------------------------------------------- #
# Kernel
# --------------------------------------------------------------------------- #
def _policy_kernel(num_actions, log_std_min, log_std_max,
                   x_ref,
                   w1_ref, b1_ref, w2_ref, b2_ref,
                   w3_ref, b3_ref, w4_ref, b4_ref,
                   wh_ref, bh_ref,
                   out_ref):
    """One batch tile: 4x (matmul + bias + relu), then one fused head matmul.

    Matmul operands are in compute_dtype (bf16 by default) on the MXU; all
    accumulation and elementwise work (bias add, relu, tanh, clip) is f32.
    """
    compute_dtype = w1_ref.dtype

    h = x_ref[...]  # (TB, IN_P) in compute_dtype
    for w_ref, b_ref in ((w1_ref, b1_ref), (w2_ref, b2_ref),
                         (w3_ref, b3_ref), (w4_ref, b4_ref)):
        acc = jnp.dot(h, w_ref[...], preferred_element_type=jnp.float32) + b_ref[...]
        h = jnp.maximum(acc, 0.0).astype(compute_dtype)

    # Fused heads: columns [0, A) = mean head (tanh), [A, 2A) = log_std head (clip).
    head = jnp.dot(h, wh_ref[...], preferred_element_type=jnp.float32) + bh_ref[...]
    col = lax.broadcasted_iota(jnp.int32, head.shape, dimension=1)
    out_ref[...] = jnp.where(
        col < num_actions,
        jnp.tanh(head),
        jnp.clip(head, log_std_min, log_std_max),
    ).astype(out_ref.dtype)


# --------------------------------------------------------------------------- #
# One-time parameter preparation (pad / cast / fuse heads)
# --------------------------------------------------------------------------- #
def prepare_params(params, compute_dtype=jnp.bfloat16, lane_multiple=None):
    """Pad, cast and head-fuse the weights ONCE.

    Returns (prepped_dict_of_arrays, num_actions).  `prepped` is a plain array
    pytree, so it can be passed straight into a jitted policy_forward.
    """
    if lane_multiple is None:
        lane_multiple = _default_lane_multiple()

    num_inputs = params["w1"].shape[0]
    hidden = params["w1"].shape[1]
    num_actions = params["wm"].shape[1]

    in_p = _round_up(num_inputs, lane_multiple)
    h_p = _round_up(hidden, lane_multiple)
    head_p = _round_up(2 * num_actions, lane_multiple)

    def pad_to(a, rows, cols, dtype):
        a = jnp.asarray(a, dtype)
        return jnp.pad(a, ((0, rows - a.shape[0]), (0, cols - a.shape[1])))

    prepped = {
        # Matmul operands in compute_dtype; biases stay f32 (added to f32 accumulator).
        "w1": pad_to(params["w1"], in_p, h_p, compute_dtype),
        "b1": pad_to(params["b1"], 1, h_p, jnp.float32),
        "w2": pad_to(params["w2"], h_p, h_p, compute_dtype),
        "b2": pad_to(params["b2"], 1, h_p, jnp.float32),
        "w3": pad_to(params["w3"], h_p, h_p, compute_dtype),
        "b3": pad_to(params["b3"], 1, h_p, jnp.float32),
        "w4": pad_to(params["w4"], h_p, h_p, compute_dtype),
        "b4": pad_to(params["b4"], 1, h_p, jnp.float32),
        # Fused heads: [mean | log_std] along the output dim.
        "wh": pad_to(jnp.concatenate([params["wm"], params["ws"]], axis=1),
                     h_p, head_p, compute_dtype),
        "bh": pad_to(jnp.concatenate([params["bm"], params["bs"]], axis=1),
                     1, head_p, jnp.float32),
    }
    return prepped, num_actions


# --------------------------------------------------------------------------- #
# Forward wrapper
# --------------------------------------------------------------------------- #
def _choose_batch_tile(B, h_p, batch_tile):
    if batch_tile is None:
        # Small hidden -> grid-overhead bound: bigger batch tile. Large hidden -> cap
        # at 256 so the (TB x H_P) f32 activations don't spill.
        batch_tile = 512 if h_p <= 512 else 256
    min_tile = 16  # bf16 sublane packing (16, 128) minimum tile
    if B <= min_tile:
        return _round_up(max(B, 1), min_tile)
    # Prefer >= 2 batch tiles so the "parallel" axis can land on both v7x TensorCores.
    two_tile = _round_up(_ceil_div(B, 2), min_tile)
    return max(min(batch_tile, two_tile), min_tile)


def policy_forward(state, prepped, *, num_actions,
                   log_std_min=-20.0, log_std_max=2.0,
                   batch_tile=None, out_dtype=jnp.float32):
    """state: (B, num_inputs) f32; prepped from prepare_params().

    Returns (mean, log_std), each (B, num_actions) f32.
    `out_dtype=jnp.bfloat16` halves output writeback bytes (useful on v5e).
    """
    B, num_inputs = state.shape
    in_p, h_p = prepped["w1"].shape
    head_p = prepped["wh"].shape[1]
    compute_dtype = prepped["w1"].dtype
    cd_bytes = jnp.dtype(compute_dtype).itemsize
    out_bytes = jnp.dtype(out_dtype).itemsize

    TB = _choose_batch_tile(B, h_p, batch_tile)
    B_P = _round_up(B, TB)
    grid = (B_P // TB,)

    # Per-call state prep (cheap): cast + pad to the lane/sublane-aligned tile grid.
    x_p = jnp.pad(state.astype(compute_dtype),
                  ((0, B_P - B), (0, in_p - num_inputs)))

    # Explicit VMEM budget: weights x1 buffer (Buffered(1)) + double-buffered
    # state/out tiles + f32 activation scratch, with headroom.
    weight_bytes = (in_p * h_p + 3 * h_p * h_p + h_p * head_p) * cd_bytes
    bias_bytes = (4 * h_p + head_p) * 4
    stream_bytes = 2 * TB * in_p * cd_bytes + 2 * TB * head_p * out_bytes
    act_bytes = 2 * TB * h_p * 4
    vmem_limit = int(1.4 * (weight_bytes + bias_bytes + stream_bytes + act_bytes)) + (2 << 20)
    vmem_limit = min(max(vmem_limit, 16 << 20), 100 << 20)

    # Advisory cost estimate so XLA can overlap this call with surrounding ops.
    flops = 2 * B_P * (in_p * h_p + 3 * h_p * h_p + h_p * head_p)
    cost = pl.CostEstimate(
        flops=flops,
        transcendentals=B_P * head_p,
        bytes_accessed=int(B_P * in_p * cd_bytes + weight_bytes + bias_bytes
                           + B_P * head_p * out_bytes),
    )

    def resident(shape):
        # Same block every grid step + single buffer -> weights stay VMEM-resident
        # with no redundant second pipeline buffer.
        return pl.BlockSpec(shape, lambda i: (0, 0), pipeline_mode=pl.Buffered(1))

    kernel = functools.partial(_policy_kernel, num_actions,
                               float(log_std_min), float(log_std_max))

    out = pl.pallas_call(
        kernel,
        out_shape=jax.ShapeDtypeStruct((B_P, head_p), out_dtype),
        grid=grid,
        in_specs=[
            pl.BlockSpec((TB, in_p), lambda i: (i, 0)),   # state: streamed over batch
            resident((in_p, h_p)), resident((1, h_p)),
            resident((h_p, h_p)), resident((1, h_p)),
            resident((h_p, h_p)), resident((1, h_p)),
            resident((h_p, h_p)), resident((1, h_p)),
            resident((h_p, head_p)), resident((1, head_p)),
        ],
        out_specs=pl.BlockSpec((TB, head_p), lambda i: (i, 0)),
        compiler_params=pltpu.CompilerParams(
            dimension_semantics=("parallel",),            # batch tiles across TCs (v7x)
            vmem_limit_bytes=vmem_limit),
        cost_estimate=cost,
    )(x_p, prepped["w1"], prepped["b1"], prepped["w2"], prepped["b2"],
      prepped["w3"], prepped["b3"], prepped["w4"], prepped["b4"],
      prepped["wh"], prepped["bh"])

    # Slice padded rows/lanes off (padded columns are benign: tanh(0)=0, clip(0)=0).
    mean = out[:B, :num_actions].astype(jnp.float32)
    log_std = out[:B, num_actions:2 * num_actions].astype(jnp.float32)
    return mean, log_std


# --------------------------------------------------------------------------- #
# References & init
# --------------------------------------------------------------------------- #
def policy_forward_ref(state, params, log_std_min=-20.0, log_std_max=2.0,
                       compute_dtype=jnp.bfloat16):
    """Pure-JAX reference with the same bf16-operand / f32-accumulate recipe."""
    def dense(x, w, b):
        return jnp.dot(x.astype(compute_dtype), w.astype(compute_dtype),
                       preferred_element_type=jnp.float32) + b

    h = state
    for i in (1, 2, 3, 4):
        h = jnp.maximum(dense(h, params[f"w{i}"], params[f"b{i}"]), 0.0)
        h = h.astype(compute_dtype).astype(jnp.float32)  # match in-kernel round-trip
    mean = jnp.tanh(dense(h, params["wm"], params["bm"]))
    log_std = jnp.clip(dense(h, params["ws"], params["bs"]), log_std_min, log_std_max)
    return mean, log_std


def policy_forward_ref_f32(state, params, log_std_min=-20.0, log_std_max=2.0):
    """Full-f32 reference matching the original PyTorch module semantics."""
    h = state
    for i in (1, 2, 3, 4):
        h = jnp.maximum(jnp.dot(h, params[f"w{i}"]) + params[f"b{i}"], 0.0)
    mean = jnp.tanh(jnp.dot(h, params["wm"]) + params["bm"])
    log_std = jnp.clip(jnp.dot(h, params["ws"]) + params["bs"], log_std_min, log_std_max)
    return mean, log_std


def init_params(key, num_inputs, num_actions, hidden_size, init_w=0.003):
    """nn.Linear-style init (uniform +-1/sqrt(fan_in)); heads uniform(-init_w, init_w).
    Weights stored as (in, out); biases as (1, out)."""
    ks = jax.random.split(key, 12)

    def lin(kw, kb, fan_in, fan_out, bound):
        w = jax.random.uniform(kw, (fan_in, fan_out), jnp.float32, -bound, bound)
        b = jax.random.uniform(kb, (1, fan_out), jnp.float32, -bound, bound)
        return w, b

    p = {}
    p["w1"], p["b1"] = lin(ks[0], ks[1], num_inputs, hidden_size, 1.0 / jnp.sqrt(num_inputs))
    p["w2"], p["b2"] = lin(ks[2], ks[3], hidden_size, hidden_size, 1.0 / jnp.sqrt(hidden_size))
    p["w3"], p["b3"] = lin(ks[4], ks[5], hidden_size, hidden_size, 1.0 / jnp.sqrt(hidden_size))
    p["w4"], p["b4"] = lin(ks[6], ks[7], hidden_size, hidden_size, 1.0 / jnp.sqrt(hidden_size))
    p["wm"], p["bm"] = lin(ks[8], ks[9], hidden_size, num_actions, init_w)
    p["ws"], p["bs"] = lin(ks[10], ks[11], hidden_size, num_actions, init_w)
    return p


# TODO(synk): evaluate()/get_action()/sample_action() involve host-side Normal sampling
# and are not part of forward(); only the forward pass is implemented as a kernel.

if __name__ == "__main__":
    # Small, module-consistent shapes.  At these toy shapes launch overhead dominates;
    # the kernel is designed to pay off at batch sizes in the hundreds+.
    batch = 2
    num_inputs = 16
    num_actions = 8
    hidden_size = 32

    key = jax.random.PRNGKey(0)
    k_state, k_params = jax.random.split(key)

    state = jax.random.normal(k_state, (batch, num_inputs), jnp.float32)
    params = init_params(k_params, num_inputs, num_actions, hidden_size)

    # One-time preparation (pad / cast / fuse heads) -- NOT on the per-call path.
    prepped, n_act = prepare_params(params, compute_dtype=jnp.bfloat16)

    fwd = jax.jit(functools.partial(policy_forward, num_actions=n_act))
    mean, log_std = fwd(state, prepped)
    jax.block_until_ready((mean, log_std))

    # Shape / range checks (forward semantics).
    assert mean.shape == (batch, num_actions)
    assert log_std.shape == (batch, num_actions)
    assert bool(jnp.all(jnp.abs(mean) <= 1.0))
    assert bool(jnp.all((log_std >= -20.0) & (log_std <= 2.0)))

    # Numerical check against a pure-JAX reference using the same precision recipe.
    mean_ref, log_std_ref = jax.jit(policy_forward_ref)(state, params)
    assert bool(jnp.allclose(mean, mean_ref, atol=1e-3, rtol=1e-2))
    assert bool(jnp.allclose(log_std, log_std_ref, atol=1e-3, rtol=1e-2))

    # Sanity check against the full-f32 PyTorch-faithful reference (looser tolerance
    # since the kernel uses bf16 matmul operands / activations).
    mean_f32, log_std_f32 = jax.jit(policy_forward_ref_f32)(state, params)
    assert bool(jnp.allclose(mean, mean_f32, atol=1e-2, rtol=2e-2))
    assert bool(jnp.allclose(log_std, log_std_f32, atol=1e-2, rtol=2e-2))

    print("KERNEL_OK")
</pallas_src>

<mosaic_0001>
module attributes {stable_mosaic.version = 11 : i64} {
  func.func @_policy_kernel(%arg0: i32, %arg1: memref<16x128xbf16, #tpu.memory_space<vmem>>, %arg2: memref<128x128xbf16, #tpu.memory_space<vmem>>, %arg3: memref<1x128xf32, #tpu.memory_space<vmem>>, %arg4: memref<128x128xbf16, #tpu.memory_space<vmem>>, %arg5: memref<1x128xf32, #tpu.memory_space<vmem>>, %arg6: memref<128x128xbf16, #tpu.memory_space<vmem>>, %arg7: memref<1x128xf32, #tpu.memory_space<vmem>>, %arg8: memref<128x128xbf16, #tpu.memory_space<vmem>>, %arg9: memref<1x128xf32, #tpu.memory_space<vmem>>, %arg10: memref<128x128xbf16, #tpu.memory_space<vmem>>, %arg11: memref<1x128xf32, #tpu.memory_space<vmem>>, %arg12: memref<16x128xf32, #tpu.memory_space<vmem>>) attributes {dimension_semantics = [#tpu.dimension_semantics<parallel>], iteration_bounds = array<i64: 1>, scalar_prefetch = 0 : i64, scratch_operands = 0 : i64, tpu.core_type = #tpu.core_type<tc>, window_params = [{transform_indices = @transform_0, window_bounds = array<i64: 16, 128>}, {pipeline_mode = #tpu.pipeline_mode<synchronous>, transform_indices = @transform_1, window_bounds = array<i64: 128, 128>}, {pipeline_mode = #tpu.pipeline_mode<synchronous>, transform_indices = @transform_2, window_bounds = array<i64: 1, 128>}, {pipeline_mode = #tpu.pipeline_mode<synchronous>, transform_indices = @transform_3, window_bounds = array<i64: 128, 128>}, {pipeline_mode = #tpu.pipeline_mode<synchronous>, transform_indices = @transform_4, window_bounds = array<i64: 1, 128>}, {pipeline_mode = #tpu.pipeline_mode<synchronous>, transform_indices = @transform_5, window_bounds = array<i64: 128, 128>}, {pipeline_mode = #tpu.pipeline_mode<synchronous>, transform_indices = @transform_6, window_bounds = array<i64: 1, 128>}, {pipeline_mode = #tpu.pipeline_mode<synchronous>, transform_indices = @transform_7, window_bounds = array<i64: 128, 128>}, {pipeline_mode = #tpu.pipeline_mode<synchronous>, transform_indices = @transform_8, window_bounds = array<i64: 1, 128>}, {pipeline_mode = #tpu.pipeline_mode<synchronous>, transform_indices = @transform_9, window_bounds = array<i64: 128, 128>}, {pipeline_mode = #tpu.pipeline_mode<synchronous>, transform_indices = @transform_10, window_bounds = array<i64: 1, 128>}, {transform_indices = @transform_11, window_bounds = array<i64: 16, 128>}]} {
    %c0 = arith.constant 0 : index
    %c0_0 = arith.constant 0 : index
    %0 = vector.load %arg1[%c0, %c0_0] : memref<16x128xbf16, #tpu.memory_space<vmem>>, vector<16x128xbf16>
    %c0_1 = arith.constant 0 : index
    %c0_2 = arith.constant 0 : index
    %1 = vector.load %arg2[%c0_1, %c0_2] : memref<128x128xbf16, #tpu.memory_space<vmem>>, vector<128x128xbf16>
    %cst = arith.constant dense<0.000000e+00> : vector<16x128xf32>
    %2 = tpu.matmul %0, %1, %cst {dimension_numbers = #tpu.dot_dimension_numbers<[1], [0], [0], [1], [0, 0, 1, 1], [], []>} : vector<16x128xbf16>, vector<128x128xbf16>, vector<16x128xf32> -> vector<16x128xf32>
    %c0_3 = arith.constant 0 : index
    %c0_4 = arith.constant 0 : index
    %3 = vector.load %arg3[%c0_3, %c0_4] : memref<1x128xf32, #tpu.memory_space<vmem>>, vector<1x128xf32>
    %4 = vector.broadcast %3 : vector<1x128xf32> to vector<16x128xf32>
    %5 = arith.addf %2, %4 : vector<16x128xf32>
    %cst_5 = arith.constant 0.000000e+00 : f32
    %6 = vector.broadcast %cst_5 : f32 to vector<16x128xf32>
    %7 = arith.maximumf %5, %6 : vector<16x128xf32>
    %8 = arith.truncf %7 : vector<16x128xf32> to vector<16x128xbf16>
    %c0_6 = arith.constant 0 : index
    %c0_7 = arith.constant 0 : index
    %9 = vector.load %arg4[%c0_6, %c0_7] : memref<128x128xbf16, #tpu.memory_space<vmem>>, vector<128x128xbf16>
    %cst_8 = arith.constant dense<0.000000e+00> : vector<16x128xf32>
    %10 = tpu.matmul %8, %9, %cst_8 {dimension_numbers = #tpu.dot_dimension_numbers<[1], [0], [0], [1], [0, 0, 1, 1], [], []>} : vector<16x128xbf16>, vector<128x128xbf16>, vector<16x128xf32> -> vector<16x128xf32>
    %c0_9 = arith.constant 0 : index
    %c0_10 = arith.constant 0 : index
    %11 = vector.load %arg5[%c0_9, %c0_10] : memref<1x128xf32, #tpu.memory_space<vmem>>, vector<1x128xf32>
    %12 = vector.broadcast %11 : vector<1x128xf32> to vector<16x128xf32>
    %13 = arith.addf %10, %12 : vector<16x128xf32>
    %cst_11 = arith.constant 0.000000e+00 : f32
    %14 = vector.broadcast %cst_11 : f32 to vector<16x128xf32>
    %15 = arith.maximumf %13, %14 : vector<16x128xf32>
    %16 = arith.truncf %15 : vector<16x128xf32> to vector<16x128xbf16>
    %c0_12 = arith.constant 0 : index
    %c0_13 = arith.constant 0 : index
    %17 = vector.load %arg6[%c0_12, %c0_13] : memref<128x128xbf16, #tpu.memory_space<vmem>>, vector<128x128xbf16>
    %cst_14 = arith.constant dense<0.000000e+00> : vector<16x128xf32>
    %18 = tpu.matmul %16, %17, %cst_14 {dimension_numbers = #tpu.dot_dimension_numbers<[1], [0], [0], [1], [0, 0, 1, 1], [], []>} : vector<16x128xbf16>, vector<128x128xbf16>, vector<16x128xf32> -> vector<16x128xf32>
    %c0_15 = arith.constant 0 : index
    %c0_16 = arith.constant 0 : index
    %19 = vector.load %arg7[%c0_15, %c0_16] : memref<1x128xf32, #tpu.memory_space<vmem>>, vector<1x128xf32>
    %20 = vector.broadcast %19 : vector<1x128xf32> to vector<16x128xf32>
    %21 = arith.addf %18, %20 : vector<16x128xf32>
    %cst_17 = arith.constant 0.000000e+00 : f32
    %22 = vector.broadcast %cst_17 : f32 to vector<16x128xf32>
    %23 = arith.maximumf %21, %22 : vector<16x128xf32>
    %24 = arith.truncf %23 : vector<16x128xf32> to vector<16x128xbf16>
    %c0_18 = arith.constant 0 : index
    %c0_19 = arith.constant 0 : index
    %25 = vector.load %arg8[%c0_18, %c0_19] : memref<128x128xbf16, #tpu.memory_space<vmem>>, vector<128x128xbf16>
    %cst_20 = arith.constant dense<0.000000e+00> : vector<16x128xf32>
    %26 = tpu.matmul %24, %25, %cst_20 {dimension_numbers = #tpu.dot_dimension_numbers<[1], [0], [0], [1], [0, 0, 1, 1], [], []>} : vector<16x128xbf16>, vector<128x128xbf16>, vector<16x128xf32> -> vector<16x128xf32>
    %c0_21 = arith.constant 0 : index
    %c0_22 = arith.constant 0 : index
    %27 = vector.load %arg9[%c0_21, %c0_22] : memref<1x128xf32, #tpu.memory_space<vmem>>, vector<1x128xf32>
    %28 = vector.broadcast %27 : vector<1x128xf32> to vector<16x128xf32>
    %29 = arith.addf %26, %28 : vector<16x128xf32>
    %cst_23 = arith.constant 0.000000e+00 : f32
    %30 = vector.broadcast %cst_23 : f32 to vector<16x128xf32>
    %31 = arith.maximumf %29, %30 : vector<16x128xf32>
    %32 = arith.truncf %31 : vector<16x128xf32> to vector<16x128xbf16>
    %c0_24 = arith.constant 0 : index
    %c0_25 = arith.constant 0 : index
    %33 = vector.load %arg10[%c0_24, %c0_25] : memref<128x128xbf16, #tpu.memory_space<vmem>>, vector<128x128xbf16>
    %cst_26 = arith.constant dense<0.000000e+00> : vector<16x128xf32>
    %34 = tpu.matmul %32, %33, %cst_26 {dimension_numbers = #tpu.dot_dimension_numbers<[1], [0], [0], [1], [0, 0, 1, 1], [], []>} : vector<16x128xbf16>, vector<128x128xbf16>, vector<16x128xf32> -> vector<16x128xf32>
    %c0_27 = arith.constant 0 : index
    %c0_28 = arith.constant 0 : index
    %35 = vector.load %arg11[%c0_27, %c0_28] : memref<1x128xf32, #tpu.memory_space<vmem>>, vector<1x128xf32>
    %36 = vector.broadcast %35 : vector<1x128xf32> to vector<16x128xf32>
    %37 = arith.addf %34, %36 : vector<16x128xf32>
    %38 = tpu.iota {dimensions = array<i32: 1>} : vector<16x128xi32>
    %c8_i32 = arith.constant 8 : i32
    %39 = vector.broadcast %c8_i32 : i32 to vector<16x128xi32>
    %40 = arith.cmpi slt, %38, %39 : vector<16x128xi32>
    %41 = math.tanh %37 : vector<16x128xf32>
    %cst_29 = arith.constant -2.000000e+01 : f32
    %cst_30 = arith.constant 2.000000e+00 : f32
    %42 = vector.broadcast %cst_29 : f32 to vector<16x128xf32>
    %43 = arith.maximumf %42, %37 : vector<16x128xf32>
    %44 = vector.broadcast %cst_30 : f32 to vector<16x128xf32>
    %45 = arith.minimumf %44, %43 : vector<16x128xf32>
    %46 = arith.select %40, %41, %45 : vector<16x128xi1>, vector<16x128xf32>
    %c0_31 = arith.constant 0 : index
    %c0_32 = arith.constant 0 : index
    %47 = vector.load %arg12[%c0_31, %c0_32] : memref<16x128xf32, #tpu.memory_space<vmem>>, vector<16x128xf32>
    tpu.vector_store %arg12[%c0_31, %c0_32], %46 {strides = array<i32>} : memref<16x128xf32, #tpu.memory_space<vmem>>, vector<16x128xf32>,
    return
  }
  func.func @transform_0(%arg0: i32) -> (i32, i32) {
    %c0_i32 = arith.constant 0 : i32
    %c0_i32_0 = arith.constant 0 : i32
    return %arg0, %c0_i32 : i32, i32
  }
  func.func @transform_1(%arg0: i32) -> (i32, i32) {
    %c0_i32 = arith.constant 0 : i32
    %c0_i32_0 = arith.constant 0 : i32
    %c0_i32_1 = arith.constant 0 : i32
    return %c0_i32, %c0_i32_0 : i32, i32
  }
  func.func @transform_2(%arg0: i32) -> (i32, i32) {
    %c0_i32 = arith.constant 0 : i32
    %c0_i32_0 = arith.constant 0 : i32
    %c0_i32_1 = arith.constant 0 : i32
    return %c0_i32, %c0_i32_0 : i32, i32
  }
  func.func @transform_3(%arg0: i32) -> (i32, i32) {
    %c0_i32 = arith.constant 0 : i32
    %c0_i32_0 = arith.constant 0 : i32
    %c0_i32_1 = arith.constant 0 : i32
    return %c0_i32, %c0_i32_0 : i32, i32
  }
  func.func @transform_4(%arg0: i32) -> (i32, i32) {
    %c0_i32 = arith.constant 0 : i32
    %c0_i32_0 = arith.constant 0 : i32
    %c0_i32_1 = arith.constant 0 : i32
    return %c0_i32, %c0_i32_0 : i32, i32
  }
  func.func @transform_5(%arg0: i32) -> (i32, i32) {
    %c0_i32 = arith.constant 0 : i32
    %c0_i32_0 = arith.constant 0 : i32
    %c0_i32_1 = arith.constant 0 : i32
    return %c0_i32, %c0_i32_0 : i32, i32
  }
  func.func @transform_6(%arg0: i32) -> (i32, i32) {
    %c0_i32 = arith.constant 0 : i32
    %c0_i32_0 = arith.constant 0 : i32
    %c0_i32_1 = arith.constant 0 : i32
    return %c0_i32, %c0_i32_0 : i32, i32
  }
  func.func @transform_7(%arg0: i32) -> (i32, i32) {
    %c0_i32 = arith.constant 0 : i32
    %c0_i32_0 = arith.constant 0 : i32
    %c0_i32_1 = arith.constant 0 : i32
    return %c0_i32, %c0_i32_0 : i32, i32
  }
  func.func @transform_8(%arg0: i32) -> (i32, i32) {
    %c0_i32 = arith.constant 0 : i32
    %c0_i32_0 = arith.constant 0 : i32
    %c0_i32_1 = arith.constant 0 : i32
    return %c0_i32, %c0_i32_0 : i32, i32
  }
  func.func @transform_9(%arg0: i32) -> (i32, i32) {
    %c0_i32 = arith.constant 0 : i32
    %c0_i32_0 = arith.constant 0 : i32
    %c0_i32_1 = arith.constant 0 : i32
    return %c0_i32, %c0_i32_0 : i32, i32
  }
  func.func @transform_10(%arg0: i32) -> (i32, i32) {
    %c0_i32 = arith.constant 0 : i32
    %c0_i32_0 = arith.constant 0 : i32
    %c0_i32_1 = arith.constant 0 : i32
    return %c0_i32, %c0_i32_0 : i32, i32
  }
  func.func @transform_11(%arg0: i32) -> (i32, i32) {
    %c0_i32 = arith.constant 0 : i32
    %c0_i32_0 = arith.constant 0 : i32
    return %arg0, %c0_i32 : i32, i32
  }
}

</mosaic_0001>

<llo_original>
// kernel: policy_forward.1
$region0: #{policy_forward.1}
  #allocation0 [shape = 'u32[]', space=smem, size = 0x4, offset = 0x4, fixed_abs, tag = 'smem constant byte address 0x4 - core index']
  #allocation1 [shape = 'u32[144,128]{1,0:T(1,128)}', space=vmem, size = 0x12000, scoped, tag = 'internal scratch']
  %s0 = inlined_call_operand.vmem [shape: bf16[16,128], index: 0, kind: input, shape index: {}]
  %s1 = inlined_call_operand.hbm [shape: bf16[128,128], index: 1, kind: input, shape index: {}]
  %s2 = inlined_call_operand.vmem [shape: f32[1,128], index: 2, kind: input, shape index: {}]
  %s3 = inlined_call_operand.hbm [shape: bf16[128,128], index: 3, kind: input, shape index: {}]
  %s4 = inlined_call_operand.vmem [shape: f32[1,128], index: 4, kind: input, shape index: {}]
  %s5 = inlined_call_operand.hbm [shape: bf16[128,128], index: 5, kind: input, shape index: {}]
  %s6 = inlined_call_operand.vmem [shape: f32[1,128], index: 6, kind: input, shape index: {}]
  %s7 = inlined_call_operand.hbm [shape: bf16[128,128], index: 7, kind: input, shape index: {}]
  %s8 = inlined_call_operand.vmem [shape: f32[1,128], index: 8, kind: input, shape index: {}]
  %s9 = inlined_call_operand.hbm [shape: bf16[128,128], index: 9, kind: input, shape index: {}]
  %s10 = inlined_call_operand.vmem [shape: f32[1,128], index: 10, kind: input, shape index: {}]
  %s11 = inlined_call_operand.vmem [shape: f32[16,128], index: 11, kind: output, shape index: {}]
  %s12 = sld [smem:[#allocation0]]
  $region74: #{policy_forward.1} parent=0
    _
  %s14 = ssub.s32 1, %s12
  %s15 = scalar_select 0, %s14, %s12
  $region1: #{policy_forward.1} parent=0
    #allocation2 [shape = 'u8[32768]{0}', space=vmem, size = 0x8000, scoped, tag = 'input window, operand 1, single buffered']
    #allocation3 [shape = 's32[1]{0}', space=sflag, size = 0x4, scoped, tag = 'scoped memory for policy_forward.1']
    #allocation4 [shape = 'u8[32768]{0}', space=vmem, size = 0x8000, scoped, tag = 'input window, operand 3, single buffered']
    #allocation5 [shape = 's32[1]{0}', space=sflag, size = 0x4, scoped, tag = 'scoped memory for policy_forward.1']
    #allocation6 [shape = 'u8[32768]{0}', space=vmem, size = 0x8000, scoped, tag = 'input window, operand 5, single buffered']
    #allocation7 [shape = 'u8[32768]{0}', space=vmem, size = 0x8000, scoped, tag = 'input window, operand 7, single buffered']
    #allocation8 [shape = 's32[1]{0}', space=sflag, size = 0x4, scoped, tag = 'scoped memory for policy_forward.1']
    #allocation9 [shape = 'u8[32768]{0}', space=vmem, size = 0x8000, scoped, tag = 'input window, operand 9, single buffered']
    %16 = vsyncpa [#allocation3], 0
    %17 = vsyncpa [#allocation5], 0
    %18 = vsyncpa [#allocation8], 0
    // Predicated region
    $region2: #{policy_forward.1} parent=1 // pred_check
      _
    $region3: #{policy_forward.1} parent=1 // pred_check_branch
      %20 = sbr.rel (0) target = $region5
    $region4: #{policy_forward.1} parent=1 // pred_region
      _
    $region5: #{policy_forward.1} parent=1 // pred_fallthru
      _
    // Predicated region
    $region6: #{policy_forward.1} parent=1 // pred_check
      _
    $region7: #{policy_forward.1} parent=1 // pred_check_branch
      %22 = sbr.rel (0) target = $region9
    $region8: #{policy_forward.1} parent=1 // pred_region
      %s24 = ssub.s32 1024, 1024
      %25 = vsyncadd [#allocation3], %s24
      %s26 = sshll.u32 [#allocation2], 4
      %s27 = int_to_ptr.vmem [resolvable:$true] %s26
      %32 = dma.hbm_to_vmem [thread:$0]  %s1, 1024, %s27, [#allocation3], 64, 64, 4
    $region9: #{policy_forward.1} parent=1 // pred_fallthru
      _
    // Predicated region
    $region10: #{policy_forward.1} parent=1 // pred_check
      _
    $region11: #{policy_forward.1} parent=1 // pred_check_branch
      %34 = sbr.rel (0) target = $region13
    $region12: #{policy_forward.1} parent=1 // pred_region
      _
    $region13: #{policy_forward.1} parent=1 // pred_fallthru
      _
    // Predicated region
    $region14: #{policy_forward.1} parent=1 // pred_check
      _
    $region15: #{policy_forward.1} parent=1 // pred_check_branch
      %36 = sbr.rel (0) target = $region17
    $region16: #{policy_forward.1} parent=1 // pred_region
      %s38 = ssub.s32 1024, 1024
      %39 = vsyncadd [#allocation5], %s38
      %s40 = sshll.u32 [#allocation4], 4
      %s41 = int_to_ptr.vmem [resolvable:$true] %s40
      %46 = dma.hbm_to_vmem [thread:$0]  %s3, 1024, %s41, [#allocation5], 64, 64, 4
    $region17: #{policy_forward.1} parent=1 // pred_fallthru
      _
    // Predicated region
    $region18: #{policy_forward.1} parent=1 // pred_check
      _
    $region19: #{policy_forward.1} parent=1 // pred_check_branch
      %48 = sbr.rel (0) target = $region21
    $region20: #{policy_forward.1} parent=1 // pred_region
      _
    $region21: #{policy_forward.1} parent=1 // pred_fallthru
      _
    // Predicated region
    $region22: #{policy_forward.1} parent=1 // pred_check
      _
    $region23: #{policy_forward.1} parent=1 // pred_check_branch
      %50 = sbr.rel (0) target = $region25
    $region24: #{policy_forward.1} parent=1 // pred_region
      %s52 = ssub.s32 1024, 1024
      %53 = vsyncadd [#allocation5], %s52
      %s54 = sshll.u32 [#allocation6], 4
      %s55 = int_to_ptr.vmem [resolvable:$true] %s54
      %60 = dma.hbm_to_vmem [thread:$0]  %s5, 1024, %s55, [#allocation5], 64, 64, 4
    $region25: #{policy_forward.1} parent=1 // pred_fallthru
      _
    // Predicated region
    $region26: #{policy_forward.1} parent=1 // pred_check
      _
    $region27: #{policy_forward.1} parent=1 // pred_check_branch
      %62 = sbr.rel (0) target = $region29
    $region28: #{policy_forward.1} parent=1 // pred_region
      _
    $region29: #{policy_forward.1} parent=1 // pred_fallthru
      _
    // Predicated region
    $region30: #{policy_forward.1} parent=1 // pred_check
      _
    $region31: #{policy_forward.1} parent=1 // pred_check_branch
      %64 = sbr.rel (0) target = $region33
    $region32: #{policy_forward.1} parent=1 // pred_region
      %s66 = ssub.s32 1024, 1024
      %67 = vsyncadd [#allocation8], %s66
      %s68 = sshll.u32 [#allocation7], 4
      %s69 = int_to_ptr.vmem [resolvable:$true] %s68
      %74 = dma.hbm_to_vmem [thread:$0]  %s7, 1024, %s69, [#allocation8], 64, 64, 4
    $region33: #{policy_forward.1} parent=1 // pred_fallthru
      _
    // Predicated region
    $region34: #{policy_forward.1} parent=1 // pred_check
      _
    $region35: #{policy_forward.1} parent=1 // pred_check_branch
      %76 = sbr.rel (0) target = $region37
    $region36: #{policy_forward.1} parent=1 // pred_region
      _
    $region37: #{policy_forward.1} parent=1 // pred_fallthru
      _
    // Predicated region
    $region38: #{policy_forward.1} parent=1 // pred_check
      _
    $region39: #{policy_forward.1} parent=1 // pred_check_branch
      %78 = sbr.rel (0) target = $region41
    $region40: #{policy_forward.1} parent=1 // pred_region
      %s80 = ssub.s32 1024, 1024
      %81 = vsyncadd [#allocation8], %s80
      %s82 = sshll.u32 [#allocation9], 4
      %s83 = int_to_ptr.vmem [resolvable:$true] %s82
      %88 = dma.hbm_to_vmem [thread:$0]  %s9, 1024, %s83, [#allocation8], 64, 64, 4
    $region41: #{policy_forward.1} parent=1 // pred_fallthru
      _
    // Predicated region
    $region42: #{policy_forward.1} parent=1 // pred_check
      _
    $region43: #{policy_forward.1} parent=1 // pred_check_branch
      %90 = sbr.rel (0) target = $region45
    $region44: #{policy_forward.1} parent=1 // pred_region
      _
    $region45: #{policy_forward.1} parent=1 // pred_fallthru
      _
    // Predicated region
    $region46: #{policy_forward.1} parent=1 // pred_check
      _
    $region47: #{policy_forward.1} parent=1 // pred_check_branch
      %92 = sbr.rel (0) target = $region49
    $region48: #{policy_forward.1} parent=1 // pred_region
      %93 = dma.done [#allocation3], 1024
    $region49: #{policy_forward.1} parent=1 // pred_fallthru
      _
    // Predicated region
    $region50: #{policy_forward.1} parent=1 // pred_check
      _
    $region51: #{policy_forward.1} parent=1 // pred_check_branch
      %95 = sbr.rel (0) target = $region53
    $region52: #{policy_forward.1} parent=1 // pred_region
      %96 = dma.done [#allocation5], 1024
    $region53: #{policy_forward.1} parent=1 // pred_fallthru
      _
    // Predicated region
    $region54: #{policy_forward.1} parent=1 // pred_check
      _
    $region55: #{policy_forward.1} parent=1 // pred_check_branch
      %98 = sbr.rel (0) target = $region57
    $region56: #{policy_forward.1} parent=1 // pred_region
      %99 = dma.done [#allocation5], 1024
    $region57: #{policy_forward.1} parent=1 // pred_fallthru
      _
    // Predicated region
    $region58: #{policy_forward.1} parent=1 // pred_check
      _
    $region59: #{policy_forward.1} parent=1 // pred_check_branch
      %101 = sbr.rel (0) target = $region61
    $region60: #{policy_forward.1} parent=1 // pred_region
      %102 = dma.done [#allocation8], 1024
    $region61: #{policy_forward.1} parent=1 // pred_fallthru
      _
    // Predicated region
    $region62: #{policy_forward.1} parent=1 // pred_check
      _
    $region63: #{policy_forward.1} parent=1 // pred_check_branch
      %104 = sbr.rel (0) target = $region65
    $region64: #{policy_forward.1} parent=1 // pred_region
      %105 = dma.done [#allocation8], 1024
    $region65: #{policy_forward.1} parent=1 // pred_fallthru
      _
    %v107 = vld [vmem:[%s0] sm:$0xf]
    %v108 = vld [vmem:[%s0 + $0x4] sm:$0xf]
    %v109 = vld [vmem:[#allocation2] sm:$0xf]
    %v110 = vld [vmem:[#allocation2 + $0x4] sm:$0xf]
    %v111 = vld [vmem:[#allocation2 + $0x8] sm:$0xf]
    %v112 = vld [vmem:[#allocation2 + $0xc] sm:$0xf]
    %v113 = vld [vmem:[#allocation2 + $0x10] sm:$0xf]
    %v114 = vld [vmem:[#allocation2 + $0x14] sm:$0xf]
    %v115 = vld [vmem:[#allocation2 + $0x18] sm:$0xf]
    %v116 = vld [vmem:[#allocation2 + $0x1c] sm:$0xf]
    %v117 = vld [vmem:[#allocation2 + $0x20] sm:$0xf]
    %v118 = vld [vmem:[#allocation2 + $0x24] sm:$0xf]
    %v119 = vld [vmem:[#allocation2 + $0x28] sm:$0xf]
    %v120 = vld [vmem:[#allocation2 + $0x2c] sm:$0xf]
    %v121 = vld [vmem:[#allocation2 + $0x30] sm:$0xf]
    %v122 = vld [vmem:[#allocation2 + $0x34] sm:$0xf]
    %v123 = vld [vmem:[#allocation2 + $0x38] sm:$0xf]
    %v124 = vld [vmem:[#allocation2 + $0x3c] sm:$0xf]
    %v125 = vld [vmem:[%s2] sm:$0x1]
    %v127 = vlaneseq
    %v128 = vshrl.u32 %v127, 7
    %v129 = vsub.s32 0, %v128
    %v130 = vrot.slane %v125, %v129
    %v134 = vunpack.c.l.b16 %v107
    %v135 = vunpack.c.l.b16 %v108
    %v136 = vpack.c.b16 %v135, %v134
    %v154 = vunpack.c.l.b16 %v109
    %v155 = vunpack.c.l.b16 %v110
    %v156 = vunpack.c.l.b16 %v111
    %v157 = vunpack.c.l.b16 %v112
    %v158 = vunpack.c.l.b16 %v113
    %v159 = vunpack.c.l.b16 %v114
    %v160 = vunpack.c.l.b16 %v115
    %v161 = vunpack.c.l.b16 %v116
    %v162 = vunpack.c.l.b16 %v117
    %v163 = vunpack.c.l.b16 %v118
    %v164 = vunpack.c.l.b16 %v119
    %v165 = vunpack.c.l.b16 %v120
    %v166 = vunpack.c.l.b16 %v121
    %v167 = vunpack.c.l.b16 %v122
    %v168 = vunpack.c.l.b16 %v123
    %v169 = vunpack.c.l.b16 %v124
    %v170 = vpack.c.b16 %v155, %v154
    %v171 = vpack.c.b16 %v157, %v156
    %v172 = vpack.c.b16 %v159, %v158
    %v173 = vpack.c.b16 %v161, %v160
    %v174 = vpack.c.b16 %v163, %v162
    %v175 = vpack.c.b16 %v165, %v164
    %v176 = vpack.c.b16 %v167, %v166
    %v177 = vpack.c.b16 %v169, %v168
    %186 = vmatprep.subr.bf16.mxu0 0
    %187 = vmatpush1.bf16.msra.mxu0 %v170
    %188 = vmatprep.subr.bf16.mxu0 0
    %189 = vmatpush1.bf16.msra.mxu0 %v171
    %190 = vmatprep.subr.bf16.mxu0 0
    %191 = vmatpush1.bf16.msra.mxu0 %v172
    %192 = vmatprep.subr.bf16.mxu0 0
    %193 = vmatpush1.bf16.msra.mxu0 %v173
    %194 = vmatprep.subr.bf16.mxu0 0
    %195 = vmatpush1.bf16.msra.mxu0 %v174
    %196 = vmatprep.subr.bf16.mxu0 0
    %197 = vmatpush1.bf16.msra.mxu0 %v175
    %198 = vmatprep.subr.bf16.mxu0 0
    %199 = vmatpush1.bf16.msra.mxu0 %v176
    %200 = vmatprep.subr.bf16.mxu0 0
    %201 = vmatpush1.bf16.msra.mxu0 %v177
    %202 = vmatprep.subr.bf16.mxu0 0
    %203 = vmatpush1.bf16.msra.mxu0 0
    %204 = vmatprep.subr.bf16.mxu0 0
    %205 = vmatpush1.bf16.msra.mxu0 0
    %206 = vmatprep.subr.bf16.mxu0 0
    %207 = vmatpush1.bf16.msra.mxu0 0
    %208 = vmatprep.subr.bf16.mxu0 0
    %209 = vmatpush1.bf16.msra.mxu0 0
    %210 = vmatprep.subr.bf16.mxu0 0
    %211 = vmatpush1.bf16.msra.mxu0 0
    %212 = vmatprep.subr.bf16.mxu0 0
    %213 = vmatpush1.bf16.msra.mxu0 0
    %214 = vmatprep.subr.bf16.mxu0 0
    %215 = vmatpush1.bf16.msra.mxu0 0
    %216 = vmatprep.subr.bf16.mxu0 0
    %217 = vmatpush1.bf16.msra.mxu0 0
    %218 = vmatprep.mubr.bf16.mxu0 0
    %219 = vmatmul.mubr.bf16.gmra.mrb[0].mxu0 %v136
    %v220 = vpop.f32.mrb[0].mxu0
    %v221 = vadd.f32 %v130, %v220
    %v222 = vpop.f32.mrb[0].mxu0
    %v223 = vpop.f32.mrb[0].mxu0
    %v224 = vadd.f32 %v130, %v223
    %v225 = vpop.f32.mrb[0].mxu0
    %226 = vdwg.mxu0
    %v227 = vmax.f32 %v221, 0.0
    %v228 = vmax.f32 %v224, 0.0
    %v229 = vpack.c.bf16 %v228, %v227
    %v230 = vld [vmem:[#allocation4] sm:$0xf]
    %v231 = vld [vmem:[#allocation4 + $0x4] sm:$0xf]
    %v232 = vld [vmem:[#allocation4 + $0x8] sm:$0xf]
    %v233 = vld [vmem:[#allocation4 + $0xc] sm:$0xf]
    %v234 = vld [vmem:[#allocation4 + $0x10] sm:$0xf]
    %v235 = vld [vmem:[#allocation4 + $0x14] sm:$0xf]
    %v236 = vld [vmem:[#allocation4 + $0x18] sm:$0xf]
    %v237 = vld [vmem:[#allocation4 + $0x1c] sm:$0xf]
    %v238 = vld [vmem:[#allocation4 + $0x20] sm:$0xf]
    %v239 = vld [vmem:[#allocation4 + $0x24] sm:$0xf]
    %v240 = vld [vmem:[#allocation4 + $0x28] sm:$0xf]
    %v241 = vld [vmem:[#allocation4 + $0x2c] sm:$0xf]
    %v242 = vld [vmem:[#allocation4 + $0x30] sm:$0xf]
    %v243 = vld [vmem:[#allocation4 + $0x34] sm:$0xf]
    %v244 = vld [vmem:[#allocation4 + $0x38] sm:$0xf]
    %v245 = vld [vmem:[#allocation4 + $0x3c] sm:$0xf]
    %v246 = vld [vmem:[%s4] sm:$0x1]
    %v248 = vlaneseq
    %v249 = vshrl.u32 %v248, 7
    %v250 = vsub.s32 0, %v249
    %v251 = vrot.slane %v246, %v250
    %v269 = vunpack.c.l.b16 %v230
    %v270 = vunpack.c.l.b16 %v231
    %v271 = vunpack.c.l.b16 %v232
    %v272 = vunpack.c.l.b16 %v233
    %v273 = vunpack.c.l.b16 %v234
    %v274 = vunpack.c.l.b16 %v235
    %v275 = vunpack.c.l.b16 %v236
    %v276 = vunpack.c.l.b16 %v237
    %v277 = vunpack.c.l.b16 %v238
    %v278 = vunpack.c.l.b16 %v239
    %v279 = vunpack.c.l.b16 %v240
    %v280 = vunpack.c.l.b16 %v241
    %v281 = vunpack.c.l.b16 %v242
    %v282 = vunpack.c.l.b16 %v243
    %v283 = vunpack.c.l.b16 %v244
    %v284 = vunpack.c.l.b16 %v245
    %v285 = vpack.c.b16 %v270, %v269
    %v286 = vpack.c.b16 %v272, %v271
    %v287 = vpack.c.b16 %v274, %v273
    %v288 = vpack.c.b16 %v276, %v275
    %v289 = vpack.c.b16 %v278, %v277
    %v290 = vpack.c.b16 %v280, %v279
    %v291 = vpack.c.b16 %v282, %v281
    %v292 = vpack.c.b16 %v284, %v283
    %301 = vmatprep.subr.bf16.mxu0 0
    %302 = vmatpush1.bf16.msra.mxu0 %v285
    %303 = vmatprep.subr.bf16.mxu0 0
    %304 = vmatpush1.bf16.msra.mxu0 %v286
    %305 = vmatprep.subr.bf16.mxu0 0
    %306 = vmatpush1.bf16.msra.mxu0 %v287
    %307 = vmatprep.subr.bf16.mxu0 0
    %308 = vmatpush1.bf16.msra.mxu0 %v288
    %309 = vmatprep.subr.bf16.mxu0 0
    %310 = vmatpush1.bf16.msra.mxu0 %v289
    %311 = vmatprep.subr.bf16.mxu0 0
    %312 = vmatpush1.bf16.msra.mxu0 %v290
    %313 = vmatprep.subr.bf16.mxu0 0
    %314 = vmatpush1.bf16.msra.mxu0 %v291
    %315 = vmatprep.subr.bf16.mxu0 0
    %316 = vmatpush1.bf16.msra.mxu0 %v292
    %317 = vmatprep.subr.bf16.mxu0 0
    %318 = vmatpush1.bf16.msra.mxu0 0
    %319 = vmatprep.subr.bf16.mxu0 0
    %320 = vmatpush1.bf16.msra.mxu0 0
    %321 = vmatprep.subr.bf16.mxu0 0
    %322 = vmatpush1.bf16.msra.mxu0 0
    %323 = vmatprep.subr.bf16.mxu0 0
    %324 = vmatpush1.bf16.msra.mxu0 0
    %325 = vmatprep.subr.bf16.mxu0 0
    %326 = vmatpush1.bf16.msra.mxu0 0
    %327 = vmatprep.subr.bf16.mxu0 0
    %328 = vmatpush1.bf16.msra.mxu0 0
    %329 = vmatprep.subr.bf16.mxu0 0
    %330 = vmatpush1.bf16.msra.mxu0 0
    %331 = vmatprep.subr.bf16.mxu0 0
    %332 = vmatpush1.bf16.msra.mxu0 0
    %333 = vmatprep.mubr.bf16.mxu0 0
    %334 = vmatmul.mubr.bf16.gmra.mrb[0].mxu0 %v229
    %v335 = vpop.f32.mrb[0].mxu0
    %v336 = vadd.f32 %v251, %v335
    %v337 = vpop.f32.mrb[0].mxu0
    %v338 = vpop.f32.mrb[0].mxu0
    %v339 = vadd.f32 %v251, %v338
    %v340 = vpop.f32.mrb[0].mxu0
    %341 = vdwg.mxu0
    %v342 = vmax.f32 %v336, 0.0
    %v343 = vmax.f32 %v339, 0.0
    %v344 = vpack.c.bf16 %v343, %v342
    %v345 = vld [vmem:[#allocation6] sm:$0xf]
    %v346 = vld [vmem:[#allocation6 + $0x4] sm:$0xf]
    %v347 = vld [vmem:[#allocation6 + $0x8] sm:$0xf]
    %v348 = vld [vmem:[#allocation6 + $0xc] sm:$0xf]
    %v349 = vld [vmem:[#allocation6 + $0x10] sm:$0xf]
    %v350 = vld [vmem:[#allocation6 + $0x14] sm:$0xf]
    %v351 = vld [vmem:[#allocation6 + $0x18] sm:$0xf]
    %v352 = vld [vmem:[#allocation6 + $0x1c] sm:$0xf]
    %v353 = vld [vmem:[#allocation6 + $0x20] sm:$0xf]
    %v354 = vld [vmem:[#allocation6 + $0x24] sm:$0xf]
    %v355 = vld [vmem:[#allocation6 + $0x28] sm:$0xf]
    %v356 = vld [vmem:[#allocation6 + $0x2c] sm:$0xf]
    %v357 = vld [vmem:[#allocation6 + $0x30] sm:$0xf]
    %v358 = vld [vmem:[#allocation6 + $0x34] sm:$0xf]
    %v359 = vld [vmem:[#allocation6 + $0x38] sm:$0xf]
    %v360 = vld [vmem:[#allocation6 + $0x3c] sm:$0xf]
    %v361 = vld [vmem:[%s6] sm:$0x1]
    %v363 = vlaneseq
    %v364 = vshrl.u32 %v363, 7
    %v365 = vsub.s32 0, %v364
    %v366 = vrot.slane %v361, %v365
    %v384 = vunpack.c.l.b16 %v345
    %v385 = vunpack.c.l.b16 %v346
    %v386 = vunpack.c.l.b16 %v347
    %v387 = vunpack.c.l.b16 %v348
    %v388 = vunpack.c.l.b16 %v349
    %v389 = vunpack.c.l.b16 %v350
    %v390 = vunpack.c.l.b16 %v351
    %v391 = vunpack.c.l.b16 %v352
    %v392 = vunpack.c.l.b16 %v353
    %v393 = vunpack.c.l.b16 %v354
    %v394 = vunpack.c.l.b16 %v355
    %v395 = vunpack.c.l.b16 %v356
    %v396 = vunpack.c.l.b16 %v357
    %v397 = vunpack.c.l.b16 %v358
    %v398 = vunpack.c.l.b16 %v359
    %v399 = vunpack.c.l.b16 %v360
    %v400 = vpack.c.b16 %v385, %v384
    %v401 = vpack.c.b16 %v387, %v386
    %v402 = vpack.c.b16 %v389, %v388
    %v403 = vpack.c.b16 %v391, %v390
    %v404 = vpack.c.b16 %v393, %v392
    %v405 = vpack.c.b16 %v395, %v394
    %v406 = vpack.c.b16 %v397, %v396
    %v407 = vpack.c.b16 %v399, %v398
    %416 = vmatprep.subr.bf16.mxu0 0
    %417 = vmatpush1.bf16.msra.mxu0 %v400
    %418 = vmatprep.subr.bf16.mxu0 0
    %419 = vmatpush1.bf16.msra.mxu0 %v401
    %420 = vmatprep.subr.bf16.mxu0 0
    %421 = vmatpush1.bf16.msra.mxu0 %v402
    %422 = vmatprep.subr.bf16.mxu0 0
    %423 = vmatpush1.bf16.msra.mxu0 %v403
    %424 = vmatprep.subr.bf16.mxu0 0
    %425 = vmatpush1.bf16.msra.mxu0 %v404
    %426 = vmatprep.subr.bf16.mxu0 0
    %427 = vmatpush1.bf16.msra.mxu0 %v405
    %428 = vmatprep.subr.bf16.mxu0 0
    %429 = vmatpush1.bf16.msra.mxu0 %v406
    %430 = vmatprep.subr.bf16.mxu0 0
    %431 = vmatpush1.bf16.msra.mxu0 %v407
    %432 = vmatprep.subr.bf16.mxu0 0
    %433 = vmatpush1.bf16.msra.mxu0 0
    %434 = vmatprep.subr.bf16.mxu0 0
    %435 = vmatpush1.bf16.msra.mxu0 0
    %436 = vmatprep.subr.bf16.mxu0 0
    %437 = vmatpush1.bf16.msra.mxu0 0
    %438 = vmatprep.subr.bf16.mxu0 0
    %439 = vmatpush1.bf16.msra.mxu0 0
    %440 = vmatprep.subr.bf16.mxu0 0
    %441 = vmatpush1.bf16.msra.mxu0 0
    %442 = vmatprep.subr.bf16.mxu0 0
    %443 = vmatpush1.bf16.msra.mxu0 0
    %444 = vmatprep.subr.bf16.mxu0 0
    %445 = vmatpush1.bf16.msra.mxu0 0
    %446 = vmatprep.subr.bf16.mxu0 0
    %447 = vmatpush1.bf16.msra.mxu0 0
    %448 = vmatprep.mubr.bf16.mxu0 0
    %449 = vmatmul.mubr.bf16.gmra.mrb[0].mxu0 %v344
    %v450 = vpop.f32.mrb[0].mxu0
    %v451 = vadd.f32 %v366, %v450
    %v452 = vpop.f32.mrb[0].mxu0
    %v453 = vpop.f32.mrb[0].mxu0
    %v454 = vadd.f32 %v366, %v453
    %v455 = vpop.f32.mrb[0].mxu0
    %456 = vdwg.mxu0
    %v457 = vmax.f32 %v451, 0.0
    %v458 = vmax.f32 %v454, 0.0
    %v459 = vpack.c.bf16 %v458, %v457
    %v460 = vld [vmem:[#allocation7] sm:$0xf]
    %v461 = vld [vmem:[#allocation7 + $0x4] sm:$0xf]
    %v462 = vld [vmem:[#allocation7 + $0x8] sm:$0xf]
    %v463 = vld [vmem:[#allocation7 + $0xc] sm:$0xf]
    %v464 = vld [vmem:[#allocation7 + $0x10] sm:$0xf]
    %v465 = vld [vmem:[#allocation7 + $0x14] sm:$0xf]
    %v466 = vld [vmem:[#allocation7 + $0x18] sm:$0xf]
    %v467 = vld [vmem:[#allocation7 + $0x1c] sm:$0xf]
    %v468 = vld [vmem:[#allocation7 + $0x20] sm:$0xf]
    %v469 = vld [vmem:[#allocation7 + $0x24] sm:$0xf]
    %v470 = vld [vmem:[#allocation7 + $0x28] sm:$0xf]
    %v471 = vld [vmem:[#allocation7 + $0x2c] sm:$0xf]
    %v472 = vld [vmem:[#allocation7 + $0x30] sm:$0xf]
    %v473 = vld [vmem:[#allocation7 + $0x34] sm:$0xf]
    %v474 = vld [vmem:[#allocation7 + $0x38] sm:$0xf]
    %v475 = vld [vmem:[#allocation7 + $0x3c] sm:$0xf]
    %v476 = vld [vmem:[%s8] sm:$0x1]
    %v478 = vlaneseq
    %v479 = vshrl.u32 %v478, 7
    %v480 = vsub.s32 0, %v479
    %v481 = vrot.slane %v476, %v480
    %v499 = vunpack.c.l.b16 %v460
    %v500 = vunpack.c.l.b16 %v461
    %v501 = vunpack.c.l.b16 %v462
    %v502 = vunpack.c.l.b16 %v463
    %v503 = vunpack.c.l.b16 %v464
    %v504 = vunpack.c.l.b16 %v465
    %v505 = vunpack.c.l.b16 %v466
    %v506 = vunpack.c.l.b16 %v467
    %v507 = vunpack.c.l.b16 %v468
    %v508 = vunpack.c.l.b16 %v469
    %v509 = vunpack.c.l.b16 %v470
    %v510 = vunpack.c.l.b16 %v471
    %v511 = vunpack.c.l.b16 %v472
    %v512 = vunpack.c.l.b16 %v473
    %v513 = vunpack.c.l.b16 %v474
    %v514 = vunpack.c.l.b16 %v475
    %v515 = vpack.c.b16 %v500, %v499
    %v516 = vpack.c.b16 %v502, %v501
    %v517 = vpack.c.b16 %v504, %v503
    %v518 = vpack.c.b16 %v506, %v505
    %v519 = vpack.c.b16 %v508, %v507
    %v520 = vpack.c.b16 %v510, %v509
    %v521 = vpack.c.b16 %v512, %v511
    %v522 = vpack.c.b16 %v514, %v513
    %531 = vmatprep.subr.bf16.mxu0 0
    %532 = vmatpush1.bf16.msra.mxu0 %v515
    %533 = vmatprep.subr.bf16.mxu0 0
    %534 = vmatpush1.bf16.msra.mxu0 %v516
    %535 = vmatprep.subr.bf16.mxu0 0
    %536 = vmatpush1.bf16.msra.mxu0 %v517
    %537 = vmatprep.subr.bf16.mxu0 0
    %538 = vmatpush1.bf16.msra.mxu0 %v518
    %539 = vmatprep.subr.bf16.mxu0 0
    %540 = vmatpush1.bf16.msra.mxu0 %v519
    %541 = vmatprep.subr.bf16.mxu0 0
    %542 = vmatpush1.bf16.msra.mxu0 %v520
    %543 = vmatprep.subr.bf16.mxu0 0
    %544 = vmatpush1.bf16.msra.mxu0 %v521
    %545 = vmatprep.subr.bf16.mxu0 0
    %546 = vmatpush1.bf16.msra.mxu0 %v522
    %547 = vmatprep.subr.bf16.mxu0 0
    %548 = vmatpush1.bf16.msra.mxu0 0
    %549 = vmatprep.subr.bf16.mxu0 0
    %550 = vmatpush1.bf16.msra.mxu0 0
    %551 = vmatprep.subr.bf16.mxu0 0
    %552 = vmatpush1.bf16.msra.mxu0 0
    %553 = vmatprep.subr.bf16.mxu0 0
    %554 = vmatpush1.bf16.msra.mxu0 0
    %555 = vmatprep.subr.bf16.mxu0 0
    %556 = vmatpush1.bf16.msra.mxu0 0
    %557 = vmatprep.subr.bf16.mxu0 0
    %558 = vmatpush1.bf16.msra.mxu0 0
    %559 = vmatprep.subr.bf16.mxu0 0
    %560 = vmatpush1.bf16.msra.mxu0 0
    %561 = vmatprep.subr.bf16.mxu0 0
    %562 = vmatpush1.bf16.msra.mxu0 0
    %563 = vmatprep.mubr.bf16.mxu0 0
    %564 = vmatmul.mubr.bf16.gmra.mrb[0].mxu0 %v459
    %v565 = vpop.f32.mrb[0].mxu0
    %v566 = vadd.f32 %v481, %v565
    %v567 = vpop.f32.mrb[0].mxu0
    %v568 = vpop.f32.mrb[0].mxu0
    %v569 = vadd.f32 %v481, %v568
    %v570 = vpop.f32.mrb[0].mxu0
    %571 = vdwg.mxu0
    %v572 = vmax.f32 %v566, 0.0
    %v573 = vmax.f32 %v569, 0.0
    %v574 = vpack.c.bf16 %v573, %v572
    %v575 = vld [vmem:[#allocation9] sm:$0xf]
    %v576 = vld [vmem:[#allocation9 + $0x4] sm:$0xf]
    %v577 = vld [vmem:[#allocation9 + $0x8] sm:$0xf]
    %v578 = vld [vmem:[#allocation9 + $0xc] sm:$0xf]
    %v579 = vld [vmem:[#allocation9 + $0x10] sm:$0xf]
    %v580 = vld [vmem:[#allocation9 + $0x14] sm:$0xf]
    %v581 = vld [vmem:[#allocation9 + $0x18] sm:$0xf]
    %v582 = vld [vmem:[#allocation9 + $0x1c] sm:$0xf]
    %v583 = vld [vmem:[#allocation9 + $0x20] sm:$0xf]
    %v584 = vld [vmem:[#allocation9 + $0x24] sm:$0xf]
    %v585 = vld [vmem:[#allocation9 + $0x28] sm:$0xf]
    %v586 = vld [vmem:[#allocation9 + $0x2c] sm:$0xf]
    %v587 = vld [vmem:[#allocation9 + $0x30] sm:$0xf]
    %v588 = vld [vmem:[#allocation9 + $0x34] sm:$0xf]
    %v589 = vld [vmem:[#allocation9 + $0x38] sm:$0xf]
    %v590 = vld [vmem:[#allocation9 + $0x3c] sm:$0xf]
    %v591 = vld [vmem:[%s10] sm:$0x1]
    %v593 = vlaneseq
    %v594 = vshrl.u32 %v593, 7
    %v595 = vsub.s32 0, %v594
    %v596 = vrot.slane %v591, %v595
    %v614 = vunpack.c.l.b16 %v575
    %v615 = vunpack.c.l.b16 %v576
    %v616 = vunpack.c.l.b16 %v577
    %v617 = vunpack.c.l.b16 %v578
    %v618 = vunpack.c.l.b16 %v579
    %v619 = vunpack.c.l.b16 %v580
    %v620 = vunpack.c.l.b16 %v581
    %v621 = vunpack.c.l.b16 %v582
    %v622 = vunpack.c.l.b16 %v583
    %v623 = vunpack.c.l.b16 %v584
    %v624 = vunpack.c.l.b16 %v585
    %v625 = vunpack.c.l.b16 %v586
    %v626 = vunpack.c.l.b16 %v587
    %v627 = vunpack.c.l.b16 %v588
    %v628 = vunpack.c.l.b16 %v589
    %v629 = vunpack.c.l.b16 %v590
    %v630 = vpack.c.b16 %v615, %v614
    %v631 = vpack.c.b16 %v617, %v616
    %v632 = vpack.c.b16 %v619, %v618
    %v633 = vpack.c.b16 %v621, %v620
    %v634 = vpack.c.b16 %v623, %v622
    %v635 = vpack.c.b16 %v625, %v624
    %v636 = vpack.c.b16 %v627, %v626
    %v637 = vpack.c.b16 %v629, %v628
    %646 = vmatprep.subr.bf16.mxu0 0
    %647 = vmatpush1.bf16.msra.mxu0 %v630
    %648 = vmatprep.subr.bf16.mxu0 0
    %649 = vmatpush1.bf16.msra.mxu0 %v631
    %650 = vmatprep.subr.bf16.mxu0 0
    %651 = vmatpush1.bf16.msra.mxu0 %v632
    %652 = vmatprep.subr.bf16.mxu0 0
    %653 = vmatpush1.bf16.msra.mxu0 %v633
    %654 = vmatprep.subr.bf16.mxu0 0
    %655 = vmatpush1.bf16.msra.mxu0 %v634
    %656 = vmatprep.subr.bf16.mxu0 0
    %657 = vmatpush1.bf16.msra.mxu0 %v635
    %658 = vmatprep.subr.bf16.mxu0 0
    %659 = vmatpush1.bf16.msra.mxu0 %v636
    %660 = vmatprep.subr.bf16.mxu0 0
    %661 = vmatpush1.bf16.msra.mxu0 %v637
    %662 = vmatprep.subr.bf16.mxu0 0
    %663 = vmatpush1.bf16.msra.mxu0 0
    %664 = vmatprep.subr.bf16.mxu0 0
    %665 = vmatpush1.bf16.msra.mxu0 0
    %666 = vmatprep.subr.bf16.mxu0 0
    %667 = vmatpush1.bf16.msra.mxu0 0
    %668 = vmatprep.subr.bf16.mxu0 0
    %669 = vmatpush1.bf16.msra.mxu0 0
    %670 = vmatprep.subr.bf16.mxu0 0
    %671 = vmatpush1.bf16.msra.mxu0 0
    %672 = vmatprep.subr.bf16.mxu0 0
    %673 = vmatpush1.bf16.msra.mxu0 0
    %674 = vmatprep.subr.bf16.mxu0 0
    %675 = vmatpush1.bf16.msra.mxu0 0
    %676 = vmatprep.subr.bf16.mxu0 0
    %677 = vmatpush1.bf16.msra.mxu0 0
    %678 = vmatprep.mubr.bf16.mxu0 0
    %679 = vmatmul.mubr.bf16.gmra.mrb[0].mxu0 %v574
    %v680 = vpop.f32.mrb[0].mxu0
    %v681 = vadd.f32 %v596, %v680
    %v682 = vpop.f32.mrb[0].mxu0
    %v683 = vpop.f32.mrb[0].mxu0
    %v684 = vadd.f32 %v596, %v683
    %v685 = vpop.f32.mrb[0].mxu0
    %686 = vdwg.mxu0
    %v687 = vlaneseq
    %v688 = vand.u32 %v687, 127
    %vm689 = vcmp.lt.s32.totalorder %v688, 8
    %v690 = vtanh.pop %v681
    %v691 = vtanh.pop %v684
    %v692 = vmax.f32 %v681, -20.0
    %v693 = vmax.f32 %v684, -20.0
    %v694 = vmin.f32 %v692, 2.0
    %v695 = vmin.f32 %v693, 2.0
    %v696 = vsel %vm689, %v690, %v694
    %v697 = vsel %vm689, %v691, %v695
    %698 = vst [vmem:[%s11] sm:$0xff] %v696
    %699 = vst [vmem:[%s11 + $0x8] sm:$0xff] %v697
    // Predicated region
    $region66: #{policy_forward.1} parent=1 // pred_check
      _
    $region67: #{policy_forward.1} parent=1 // pred_check_branch
      %701 = sbr.rel (0) target = $region69
    $region68: #{policy_forward.1} parent=1 // pred_region
      _
    $region69: #{policy_forward.1} parent=1 // pred_fallthru
      _
    // Predicated region
    $region70: #{policy_forward.1} parent=1 // pred_check
      _
    $region71: #{policy_forward.1} parent=1 // pred_check_branch
      %703 = sbr.rel (0) target = $region73
    $region72: #{policy_forward.1} parent=1 // pred_region
      _
    $region73: #{policy_forward.1} parent=1 // pred_fallthru
      _
    %704 = vsyncpa [#allocation3], 1
    %705 = vsyncpa [#allocation5], 1
    %706 = vsyncpa [#allocation8], 1

</llo_original>
